<compile_context>
chip_gen: v6e
topology: v6e:2x2x1
jax: 0.10.0
libtpu: 0.0.40
codegen_flags: <defaults>
</compile_context>

<pallas_src>
import math
import functools

import jax
import jax.numpy as jnp
from jax import lax
from jax.experimental import pallas as pl
from jax.experimental.pallas import tpu as pltpu

VMEM = pltpu.MemorySpace.VMEM


# --------------------------------------------------------------------------- helpers
def _erf_f32(x):
    # Abramowitz & Stegun 7.1.26 (|err| <= 1.5e-7, i.e. f32-exact) — guaranteed to lower.
    a1, a2, a3, a4, a5 = 0.254829592, -0.284496736, 1.421413741, -1.453152027, 1.061405429
    p = 0.3275911
    s = jnp.sign(x)
    ax = jnp.abs(x)
    t = 1.0 / (1.0 + p * ax)
    poly = ((((a5 * t + a4) * t + a3) * t + a2) * t + a1) * t
    return s * (1.0 - poly * jnp.exp(-ax * ax))


def _gelu_exact(x):
    # exact (erf) BERT GELU, fused into the matmul epilogue
    return 0.5 * x * (1.0 + _erf_f32(x * 0.7071067811865476))


def _pad2d(x, m0, m1):
    p0 = (-x.shape[0]) % m0
    p1 = (-x.shape[1]) % m1
    if p0 or p1:
        x = jnp.pad(x, ((0, p0), (0, p1)))
    return x


# ----------------------------------------------------------------------------- matmul
def _matmul_kernel(x_ref, w_ref, b_ref, o_ref, acc_ref, *, activation):
    @pl.when(pl.program_id(2) == 0)
    def _():
        acc_ref[...] = jnp.zeros_like(acc_ref)

    # bf16 MXU operands, f32 accumulation
    acc_ref[...] += jnp.dot(
        x_ref[...].astype(jnp.bfloat16), w_ref[...], preferred_element_type=jnp.float32
    )

    @pl.when(pl.program_id(2) == pl.num_programs(2) - 1)
    def _():
        r = acc_ref[...] + b_ref[...]
        if activation == "gelu":
            r = _gelu_exact(r)
        o_ref[...] = r.astype(o_ref.dtype)


def matmul_bias(x, w, b, activation=None, tm=256, tn=256, tk=512):
    """x: (M, K) f32, w: (K, N) f32, b: (N,) f32 -> (M, N) f32 (bias/act fused)."""
    M, K = x.shape
    N = w.shape[1]
    tm, tn, tk = min(tm, M), min(tn, N), min(tk, K)

    xp = _pad2d(x, tm, tk)
    wp = _pad2d(w.astype(jnp.bfloat16), tk, tn)          # weights fed to the MXU in bf16
    bp = jnp.pad(b, (0, (-N) % tn)).reshape(1, -1).astype(jnp.float32)
    Mp, Kp = xp.shape
    Np = wp.shape[1]

    out = pl.pallas_call(
        functools.partial(_matmul_kernel, activation=activation),
        out_shape=jax.ShapeDtypeStruct((Mp, Np), jnp.float32),
        grid=(Mp // tm, Np // tn, Kp // tk),
        in_specs=[
            pl.BlockSpec((tm, tk), lambda i, j, k: (i, k)),
            pl.BlockSpec((tk, tn), lambda i, j, k: (k, j)),
            pl.BlockSpec((1, tn), lambda i, j, k: (0, j)),
        ],
        out_specs=pl.BlockSpec((tm, tn), lambda i, j, k: (i, j)),
        scratch_shapes=[pltpu.VMEM((tm, tn), jnp.float32)],
        compiler_params=pltpu.CompilerParams(
            dimension_semantics=("parallel", "parallel", "arbitrary")
        ),
    )(xp, wp, bp)
    if (Mp, Np) != (M, N):
        out = out[:M, :N]
    return out


# -------------------------------------------------------------------------- layernorm
def _ln_kernel(x_ref, g_ref, b_ref, o_ref, *, eps):
    x = x_ref[...]
    mu = jnp.mean(x, axis=-1, keepdims=True)
    var = jnp.mean(jnp.square(x - mu), axis=-1, keepdims=True)
    o_ref[...] = ((x - mu) * lax.rsqrt(var + eps) * g_ref[...] + b_ref[...]).astype(o_ref.dtype)


def _ln_res_kernel(x_ref, r_ref, g_ref, b_ref, o_ref, *, eps):
    x = x_ref[...] + r_ref[...]                           # residual add fused in-kernel
    mu = jnp.mean(x, axis=-1, keepdims=True)
    var = jnp.mean(jnp.square(x - mu), axis=-1, keepdims=True)
    o_ref[...] = ((x - mu) * lax.rsqrt(var + eps) * g_ref[...] + b_ref[...]).astype(o_ref.dtype)


def layer_norm(x, g, b, residual=None, eps=1e-12, tm=512):
    M, N = x.shape
    tm = min(tm, M)
    Mp = pl.cdiv(M, tm) * tm
    pad = Mp - M

    def _maybe_pad(a):
        return a if pad == 0 else jnp.pad(a, ((0, pad), (0, 0)))

    inputs = [_maybe_pad(x)]
    in_specs = [pl.BlockSpec((tm, N), lambda i: (i, 0))]
    kernel = _ln_kernel
    if residual is not None:
        inputs.append(_maybe_pad(residual))
        in_specs.append(pl.BlockSpec((tm, N), lambda i: (i, 0)))
        kernel = _ln_res_kernel
    inputs += [g.reshape(1, N), b.reshape(1, N)]
    in_specs += [pl.BlockSpec((1, N), lambda i: (0, 0))] * 2

    out = pl.pallas_call(
        functools.partial(kernel, eps=eps),
        out_shape=jax.ShapeDtypeStruct((Mp, N), jnp.float32),
        grid=(Mp // tm,),
        in_specs=in_specs,
        out_specs=pl.BlockSpec((tm, N), lambda i: (i, 0)),
        compiler_params=pltpu.CompilerParams(dimension_semantics=("parallel",)),
    )(*inputs)
    return out[:M] if pad else out


# -------------------------------------------------------------------------- attention
def _attn_kernel(q_ref, k_ref, v_ref, m_ref, o_ref, *, scale):
    q = q_ref[0, 0].astype(jnp.bfloat16)                 # (L, Dh)
    kt = k_ref[0, 0].astype(jnp.bfloat16)                # (Dh, L)  pre-transposed K
    v = v_ref[0, 0].astype(jnp.bfloat16)                 # (L, Dh)
    s = jnp.dot(q, kt, preferred_element_type=jnp.float32) * scale          # (L, L) f32
    s = s + (1.0 - m_ref[0]) * -10000.0                  # in-kernel mask broadcast (1, L)
    mx = jnp.max(s, axis=-1, keepdims=True)
    e = jnp.exp(s - mx)
    denom = jnp.sum(e, axis=-1, keepdims=True)
    p = (e * pl.reciprocal(denom, approx=True)).astype(jnp.bfloat16)
    o_ref[0, 0] = jnp.dot(p, v, preferred_element_type=jnp.float32).astype(o_ref.dtype)


def mha_attention(q, k_t, v, mask_b1l, scale):
    """q/v: (B, H, L, Dh), k_t: (B, H, Dh, L), mask: (B, 1, L) -> (B, H, L, Dh)."""
    B, Hn, L, Dh = q.shape
    return pl.pallas_call(
        functools.partial(_attn_kernel, scale=scale),
        out_shape=jax.ShapeDtypeStruct((B, Hn, L, Dh), jnp.float32),
        grid=(B, Hn),
        in_specs=[
            pl.BlockSpec((1, 1, L, Dh), lambda b, h: (b, h, 0, 0)),
            pl.BlockSpec((1, 1, Dh, L), lambda b, h: (b, h, 0, 0)),
            pl.BlockSpec((1, 1, L, Dh), lambda b, h: (b, h, 0, 0)),
            pl.BlockSpec((1, 1, L), lambda b, h: (b, 0, 0)),
        ],
        out_specs=pl.BlockSpec((1, 1, L, Dh), lambda b, h: (b, h, 0, 0)),
        compiler_params=pltpu.CompilerParams(dimension_semantics=("parallel", "parallel")),
    )(q, k_t, v, mask_b1l)


# ------------------------------------------------------------------------------- LSTM
# Fused bidirectional LSTM: gate columns are interleaved [i_f,i_b,f_f,f_b,g_f,g_b,o_f,o_b]
# so both directions share one (B,2H)x(2H,8H) matmul per step (block-diagonal W_hh) and
# one sigmoid/tanh pass over 2H-wide gate slices.
def _bilstm_kernel(gx_ref, whh_ref, of_ref, ob_ref, h_scr, c_scr, *, hidden):
    L = gx_ref.shape[0]
    B = gx_ref.shape[1]
    H2 = 2 * hidden
    h_scr[...] = jnp.zeros_like(h_scr)
    c_scr[...] = jnp.zeros_like(c_scr)
    # lane mask selecting forward-direction gate columns (hoisted out of the loop)
    col = lax.broadcasted_iota(jnp.int32, (B, 8 * hidden), 1)
    is_fwd = (col // hidden) % 2 == 0

    @pl.loop(0, L)
    def _(t):
        # fwd gates come from x_t, bwd gates from x_{L-1-t}: in-kernel reverse indexing
        gpre = jnp.where(is_fwd, gx_ref[t], gx_ref[L - 1 - t])
        g = gpre + jnp.dot(
            h_scr[...].astype(jnp.bfloat16), whh_ref[...], preferred_element_type=jnp.float32
        )
        i = jax.nn.sigmoid(g[:, 0:H2])
        f = jax.nn.sigmoid(g[:, H2:2 * H2])
        gg = jnp.tanh(g[:, 2 * H2:3 * H2])
        o = jax.nn.sigmoid(g[:, 3 * H2:4 * H2])
        c = f * c_scr[...] + i * gg
        h = o * jnp.tanh(c)
        c_scr[...] = c
        h_scr[...] = h
        of_ref[t] = h[:, 0:hidden]
        ob_ref[L - 1 - t] = h[:, hidden:H2]


def bilstm(gx_lb8h, whh_blk, hidden):
    L, B, _ = gx_lb8h.shape
    return pl.pallas_call(
        functools.partial(_bilstm_kernel, hidden=hidden),
        out_shape=(
            jax.ShapeDtypeStruct((L, B, hidden), jnp.float32),
            jax.ShapeDtypeStruct((L, B, hidden), jnp.float32),
        ),
        in_specs=[pl.BlockSpec(memory_space=VMEM), pl.BlockSpec(memory_space=VMEM)],
        out_specs=(pl.BlockSpec(memory_space=VMEM), pl.BlockSpec(memory_space=VMEM)),
        scratch_shapes=[
            pltpu.VMEM((B, 2 * hidden), jnp.float32),
            pltpu.VMEM((B, 2 * hidden), jnp.float32),
        ],
    )(gx_lb8h, whh_blk.astype(jnp.bfloat16))


def _interleave_gates(wf, wb, H):
    """Last-dim 4H blocks [i,f,g,o] per direction -> 8H [i_f,i_b,f_f,f_b,g_f,g_b,o_f,o_b]."""
    parts = []
    for k in range(4):
        parts.append(wf[..., k * H:(k + 1) * H])
        parts.append(wb[..., k * H:(k + 1) * H])
    return jnp.concatenate(parts, axis=-1)


def _blockdiag_whh(whf_t, whb_t, H):
    """Per-direction (H, 4H) recurrent weights -> block-diagonal (2H, 8H), interleaved."""
    zeros = jnp.zeros((H, H), jnp.float32)
    rows_f, rows_b = [], []
    for k in range(4):
        rows_f += [whf_t[:, k * H:(k + 1) * H], zeros]
        rows_b += [zeros, whb_t[:, k * H:(k + 1) * H]]
    return jnp.concatenate(
        [jnp.concatenate(rows_f, axis=-1), jnp.concatenate(rows_b, axis=-1)], axis=0
    )


# -------------------------------------------------------------------------------- CRF
def _crf_llh_kernel(em_ref, tags_ref, mask_ref, trans_ref, start_ref, end_ref, o_ref):
    em = em_ref[...]        # (L, B, T) time-major emissions
    tags = tags_ref[...]    # (L, B) int32
    mask = mask_ref[...]    # (L, B, 1) f32 (right-padded contiguous; mask[0] == 1)
    trans = trans_ref[...]  # (T, T)
    start = start_ref[...]  # (1, T)
    end = end_ref[...]      # (1, T)
    L, B, T = em.shape

    tag_iota = lax.broadcasted_iota(jnp.int32, (L, B, T), 2)
    oh = (tags[:, :, None] == tag_iota).astype(jnp.float32)           # (L, B, T)

    # ---- numerator: score of the gold tag sequence --------------------------------
    emit_score = jnp.sum(jnp.sum(em * oh, axis=-1, keepdims=True) * mask, axis=0)   # (B, 1)
    start_score = jnp.sum(oh[0] * start, axis=-1, keepdims=True)                    # (B, 1)

    prev_oh = oh[:L - 1].reshape((L - 1) * B, T)
    cur_oh = oh[1:].reshape((L - 1) * B, T)
    tr = jnp.sum(
        jnp.dot(prev_oh, trans, preferred_element_type=jnp.float32) * cur_oh,
        axis=-1, keepdims=True,
    ).reshape(L - 1, B, 1)
    trans_score = jnp.sum(tr * mask[1:], axis=0)                                    # (B, 1)

    # TODO(synk): assumes a contiguous right-padded mask (torchcrf allows arbitrary masks).
    seq_ends = jnp.sum(mask, axis=0).astype(jnp.int32) - 1                          # (B, 1)
    pos_iota = lax.broadcasted_iota(jnp.int32, (L, B, 1), 0)
    last_sel = (pos_iota == seq_ends).astype(jnp.float32)                           # (L, B, 1)
    last_oh = jnp.sum(oh * last_sel, axis=0)                                        # (B, T)
    end_score = jnp.sum(last_oh * end, axis=-1, keepdims=True)                      # (B, 1)

    numerator = start_score + emit_score + trans_score + end_score                  # (B, 1)

    # ---- denominator: log partition via the forward algorithm ---------------------
    alpha0 = start + em_ref[0]                                                      # (B, T)

    def body(i, alpha):
        e_i = em_ref[i]                       # leading-axis dynamic read: plain offset
        m_i = mask_ref[i]                     # (B, 1)
        x = alpha[:, :, None] + trans[None, :, :] + e_i[:, None, :]                 # (B, T, T)
        mx = jnp.max(x, axis=1, keepdims=True)
        nxt = jnp.log(jnp.sum(jnp.exp(x - mx), axis=1)) + mx[:, 0, :]
        return jnp.where(m_i > 0, nxt, alpha)

    alpha = lax.fori_loop(1, L, body, alpha0)
    final = alpha + end
    fm = jnp.max(final, axis=-1, keepdims=True)
    logz = jnp.log(jnp.sum(jnp.exp(final - fm), axis=-1, keepdims=True)) + fm       # (B, 1)

    o_ref[...] = numerator - logz


def crf_loglik(emissions_lbt, tags_bl, mask_bl, crf_params):
    L, B, T = emissions_lbt.shape
    return pl.pallas_call(
        _crf_llh_kernel,
        out_shape=jax.ShapeDtypeStruct((B, 1), jnp.float32),
        in_specs=[pl.BlockSpec(memory_space=VMEM)] * 6,
        out_specs=pl.BlockSpec(memory_space=VMEM),
    )(
        emissions_lbt,
        tags_bl.astype(jnp.int32).T,                             # (L, B)
        mask_bl.astype(jnp.float32).T.reshape(L, B, 1),          # (L, B, 1)
        crf_params["transitions"],
        crf_params["start"].reshape(1, T),
        crf_params["end"].reshape(1, T),
    )


# ------------------------------------------------------------------------- BERT stack
def bert_encoder(params, input_ids, attention_mask):
    B, L = input_ids.shape
    E = params["word_emb"].shape[1]
    Hn = params["num_heads"]
    Dh = E // Hn
    scale = 1.0 / math.sqrt(Dh)

    # embeddings: word + position + token_type(0), then LayerNorm (dropout = eval identity)
    x = jnp.take(params["word_emb"], input_ids, axis=0)               # (B, L, E) gather (glue)
    x = x + params["pos_emb"][None, :L, :] + params["type_emb"][0][None, None, :]
    h = layer_norm(x.reshape(B * L, E), params["emb_ln_g"], params["emb_ln_b"])  # (B*L, E)

    mask_b1l = attention_mask.astype(jnp.float32).reshape(B, 1, L)

    for layer in params["layers"]:
        # fused Q/K/V projection: one (E, 3E) matmul, lane-dense output
        w_qkv = jnp.concatenate([layer["wq"], layer["wk"], layer["wv"]], axis=1)
        b_qkv = jnp.concatenate([layer["bq"], layer["bk"], layer["bv"]])
        qkv = matmul_bias(h, w_qkv, b_qkv).reshape(B, L, 3, Hn, Dh)
        q = qkv[:, :, 0].transpose(0, 2, 1, 3)                         # (B, Hn, L, Dh)
        k_t = qkv[:, :, 1].transpose(0, 2, 3, 1)                       # (B, Hn, Dh, L)
        v = qkv[:, :, 2].transpose(0, 2, 1, 3)                         # (B, Hn, L, Dh)

        ctx = mha_attention(q, k_t, v, mask_b1l, scale)                # (B, Hn, L, Dh)
        ctx = ctx.transpose(0, 2, 1, 3).reshape(B * L, E)

        attn_out = matmul_bias(ctx, layer["wo"], layer["bo"])
        h1 = layer_norm(attn_out, layer["ln1_g"], layer["ln1_b"], residual=h)

        inter = matmul_bias(h1, layer["w1"], layer["b1"], activation="gelu")  # fused GELU
        ffn_out = matmul_bias(inter, layer["w2"], layer["b2"])
        h = layer_norm(ffn_out, layer["ln2_g"], layer["ln2_b"], residual=h1)
    return h.reshape(B, L, E)


# ---------------------------------------------------------------------- model forward
def model_forward(params, input_ids, attention_mask, target):
    B, L = input_ids.shape
    E = params["word_emb"].shape[1]
    H = params["lstm_hidden"]
    T = params["target_size"]

    seq = bert_encoder(params, input_ids, attention_mask)             # (B, L, E)
    # TODO(synk): nn.Dropout(p=0.3) is stochastic; evaluated as identity (eval mode).

    # switch to time-major once; LSTM, tag projection and CRF all stay time-major
    seq_t = seq.transpose(1, 0, 2).reshape(L * B, E)                  # (L*B, E)

    lstm = params["lstm"]
    w_ih = _interleave_gates(lstm["fwd"]["w_ih_t"], lstm["bwd"]["w_ih_t"], H)   # (E, 8H)
    b_all = _interleave_gates(
        lstm["fwd"]["b_ih"] + lstm["fwd"]["b_hh"],
        lstm["bwd"]["b_ih"] + lstm["bwd"]["b_hh"], H)                           # (8H,)
    whh_blk = _blockdiag_whh(lstm["fwd"]["w_hh_t"], lstm["bwd"]["w_hh_t"], H)   # (2H, 8H)

    gx = matmul_bias(seq_t, w_ih, b_all).reshape(L, B, 8 * H)         # fused input proj
    h_fwd, h_bwd = bilstm(gx, whh_blk, H)                             # (L, B, H) each
    lstm_out = jnp.concatenate([h_fwd, h_bwd], axis=-1)               # (L, B, 2H)

    feats = matmul_bias(lstm_out.reshape(L * B, 2 * H), params["lin_w"], params["lin_b"])
    feats = feats.reshape(L, B, T)                                    # time-major emissions

    llh = crf_loglik(feats, target, attention_mask, params["crf"])    # (B, 1)
    return -jnp.mean(llh)  # == -CRF.forward(..., reduction='mean')


# ------------------------------------------------------------------------------ params
def init_params(key, *, vocab, max_pos, embed_dim, num_heads, num_layers, inter,
                lstm_hidden, target_size):
    keys = iter(jax.random.split(key, 256))

    def nrm(shape, scale=0.02):
        return (scale * jax.random.normal(next(keys), shape)).astype(jnp.float32)

    def uni(shape, lo=-0.1, hi=0.1):
        return jax.random.uniform(next(keys), shape, jnp.float32, lo, hi)

    layers = []
    for _ in range(num_layers):
        layers.append(dict(
            wq=nrm((embed_dim, embed_dim)), bq=jnp.zeros((embed_dim,), jnp.float32),
            wk=nrm((embed_dim, embed_dim)), bk=jnp.zeros((embed_dim,), jnp.float32),
            wv=nrm((embed_dim, embed_dim)), bv=jnp.zeros((embed_dim,), jnp.float32),
            wo=nrm((embed_dim, embed_dim)), bo=jnp.zeros((embed_dim,), jnp.float32),
            ln1_g=jnp.ones((embed_dim,), jnp.float32), ln1_b=jnp.zeros((embed_dim,), jnp.float32),
            w1=nrm((embed_dim, inter)), b1=jnp.zeros((inter,), jnp.float32),
            w2=nrm((inter, embed_dim)), b2=jnp.zeros((embed_dim,), jnp.float32),
            ln2_g=jnp.ones((embed_dim,), jnp.float32), ln2_b=jnp.zeros((embed_dim,), jnp.float32),
        ))

    k = 1.0 / math.sqrt(lstm_hidden)
    lstm = {}
    for d in ("fwd", "bwd"):
        lstm[d] = dict(
            w_ih_t=uni((embed_dim, 4 * lstm_hidden), -k, k),
            w_hh_t=uni((lstm_hidden, 4 * lstm_hidden), -k, k),
            b_ih=uni((4 * lstm_hidden,), -k, k),
            b_hh=uni((4 * lstm_hidden,), -k, k),
        )

    return dict(
        word_emb=nrm((vocab, embed_dim)),
        pos_emb=nrm((max_pos, embed_dim)),
        type_emb=nrm((2, embed_dim)),
        emb_ln_g=jnp.ones((embed_dim,), jnp.float32),
        emb_ln_b=jnp.zeros((embed_dim,), jnp.float32),
        layers=layers,
        num_heads=num_heads,
        lstm=lstm,
        lstm_hidden=lstm_hidden,
        lin_w=uni((2 * lstm_hidden, target_size)),
        lin_b=jnp.zeros((target_size,), jnp.float32),
        target_size=target_size,
        crf=dict(
            transitions=uni((target_size, target_size)),
            start=uni((target_size,)),
            end=uni((target_size,)),
        ),
    )


if __name__ == "__main__":
    # small config consistent with the module's forward:
    # EMBEDDING_DIM=32 (tiny BERT hidden), HIDDEN_SIZE=16, TARGET_SIZE=8
    B, L = 2, 8
    VOCAB, EMBED, HEADS, LAYERS, INTER = 100, 32, 2, 2, 64
    LSTM_H, TARGETS = 16, 8

    key = jax.random.PRNGKey(0)
    kp, kid, ktag = jax.random.split(key, 3)

    params = init_params(kp, vocab=VOCAB, max_pos=16, embed_dim=EMBED, num_heads=HEADS,
                         num_layers=LAYERS, inter=INTER, lstm_hidden=LSTM_H,
                         target_size=TARGETS)

    input_ids = jax.random.randint(kid, (B, L), 0, VOCAB, dtype=jnp.int32)
    # valid lengths 8 and 5; mask[:, 0] == 1 as required by torchcrf
    attention_mask = jnp.array([[1] * 8, [1, 1, 1, 1, 1, 0, 0, 0]], dtype=jnp.int32)
    target = jax.random.randint(ktag, (B, L), 0, TARGETS, dtype=jnp.int32)

    # host-side checks matching the CRF kernel's assumptions (torchcrf requirement + padding)
    assert bool(jnp.all(attention_mask[:, 0] == 1)), "mask[:, 0] must be 1 (torchcrf)"
    assert bool(jnp.all(attention_mask[:, :-1] >= attention_mask[:, 1:])), \
        "CRF kernel assumes a contiguous right-padded mask"

    loss = model_forward(params, input_ids, attention_mask, target)
    loss = jax.block_until_ready(loss)
    assert loss.shape == () and jnp.isfinite(loss)
    print("KERNEL_OK")
</pallas_src>

<mosaic_0001>
module attributes {stable_mosaic.version = 11 : i64} {
  func.func @_ln_kernel(%arg0: i32, %arg1: memref<16x32xf32, #tpu.memory_space<vmem>>, %arg2: memref<1x32xf32, #tpu.memory_space<vmem>>, %arg3: memref<1x32xf32, #tpu.memory_space<vmem>>, %arg4: memref<16x32xf32, #tpu.memory_space<vmem>>) attributes {dimension_semantics = [#tpu.dimension_semantics<parallel>], iteration_bounds = array<i64: 1>, scalar_prefetch = 0 : i64, scratch_operands = 0 : i64, tpu.core_type = #tpu.core_type<tc>, window_params = [{transform_indices = @transform_0, window_bounds = array<i64: 16, 32>}, {pipeline_mode = #tpu.pipeline_mode<synchronous>, transform_indices = @transform_1, window_bounds = array<i64: 1, 32>}, {pipeline_mode = #tpu.pipeline_mode<synchronous>, transform_indices = @transform_2, window_bounds = array<i64: 1, 32>}, {transform_indices = @transform_3, window_bounds = array<i64: 16, 32>}]} {
    %c0 = arith.constant 0 : index
    %c0_0 = arith.constant 0 : index
    %0 = vector.load %arg1[%c0, %c0_0] : memref<16x32xf32, #tpu.memory_space<vmem>>, vector<16x32xf32>
    %cst = arith.constant dense<0.000000e+00> : vector<16xf32>
    %1 = vector.multi_reduction <add>, %0, %cst [1] : vector<16x32xf32> to vector<16xf32>
    %2 = vector.shape_cast %1 : vector<16xf32> to vector<16x1xf32>
    %cst_1 = arith.constant 3.200000e+01 : f32
    %3 = vector.broadcast %cst_1 : f32 to vector<16x1xf32>
    %4 = arith.divf %2, %3 : vector<16x1xf32>
    %5 = vector.broadcast %4 : vector<16x1xf32> to vector<16x32xf32>
    %6 = arith.subf %0, %5 : vector<16x32xf32>
    %7 = arith.mulf %6, %6 : vector<16x32xf32>
    %cst_2 = arith.constant dense<0.000000e+00> : vector<16xf32>
    %8 = vector.multi_reduction <add>, %7, %cst_2 [1] : vector<16x32xf32> to vector<16xf32>
    %9 = vector.shape_cast %8 : vector<16xf32> to vector<16x1xf32>
    %cst_3 = arith.constant 3.200000e+01 : f32
    %10 = vector.broadcast %cst_3 : f32 to vector<16x1xf32>
    %11 = arith.divf %9, %10 : vector<16x1xf32>
    %12 = vector.broadcast %4 : vector<16x1xf32> to vector<16x32xf32>
    %13 = arith.subf %0, %12 : vector<16x32xf32>
    %cst_4 = arith.constant 9.99999996E-13 : f32
    %14 = vector.broadcast %cst_4 : f32 to vector<16x1xf32>
    %15 = arith.addf %11, %14 : vector<16x1xf32>
    %16 = math.rsqrt %15 : vector<16x1xf32>
    %17 = vector.broadcast %16 : vector<16x1xf32> to vector<16x32xf32>
    %18 = arith.mulf %13, %17 : vector<16x32xf32>
    %c0_5 = arith.constant 0 : index
    %c0_6 = arith.constant 0 : index
    %19 = vector.load %arg2[%c0_5, %c0_6] : memref<1x32xf32, #tpu.memory_space<vmem>>, vector<1x32xf32>
    %20 = vector.broadcast %19 : vector<1x32xf32> to vector<16x32xf32>
    %21 = arith.mulf %18, %20 : vector<16x32xf32>
    %c0_7 = arith.constant 0 : index
    %c0_8 = arith.constant 0 : index
    %22 = vector.load %arg3[%c0_7, %c0_8] : memref<1x32xf32, #tpu.memory_space<vmem>>, vector<1x32xf32>
    %23 = vector.broadcast %22 : vector<1x32xf32> to vector<16x32xf32>
    %24 = arith.addf %21, %23 : vector<16x32xf32>
    %c0_9 = arith.constant 0 : index
    %c0_10 = arith.constant 0 : index
    %25 = vector.load %arg4[%c0_9, %c0_10] : memref<16x32xf32, #tpu.memory_space<vmem>>, vector<16x32xf32>
    tpu.vector_store %arg4[%c0_9, %c0_10], %24 {strides = array<i32>} : memref<16x32xf32, #tpu.memory_space<vmem>>, vector<16x32xf32>,
    return
  }
  func.func @transform_0(%arg0: i32) -> (i32, i32) {
    %c0_i32 = arith.constant 0 : i32
    %c0_i32_0 = arith.constant 0 : i32
    return %arg0, %c0_i32 : i32, i32
  }
  func.func @transform_1(%arg0: i32) -> (i32, i32) {
    %c0_i32 = arith.constant 0 : i32
    %c0_i32_0 = arith.constant 0 : i32
    %c0_i32_1 = arith.constant 0 : i32
    return %c0_i32, %c0_i32_0 : i32, i32
  }
  func.func @transform_2(%arg0: i32) -> (i32, i32) {
    %c0_i32 = arith.constant 0 : i32
    %c0_i32_0 = arith.constant 0 : i32
    %c0_i32_1 = arith.constant 0 : i32
    return %c0_i32, %c0_i32_0 : i32, i32
  }
  func.func @transform_3(%arg0: i32) -> (i32, i32) {
    %c0_i32 = arith.constant 0 : i32
    %c0_i32_0 = arith.constant 0 : i32
    return %arg0, %c0_i32 : i32, i32
  }
}

</mosaic_0001>

<llo_original>
// kernel: tpu_custom_call.1
$region0: #{tpu_custom_call.1}
  #allocation0 [shape = 'u32[]', space=smem, size = 0x4, offset = 0x4, fixed_abs, tag = 'smem constant byte address 0x4 - core index']
  #allocation1 [shape = 'u32[144,128]{1,0:T(1,128)}', space=vmem, size = 0x12000, scoped, tag = 'internal scratch']
  %s0 = inlined_call_operand.hbm [shape: f32[16,32], index: 0, kind: input, shape index: {}]
  %s1 = inlined_call_operand.vmem [shape: f32[1,32], index: 1, kind: input, shape index: {}]
  %s2 = inlined_call_operand.vmem [shape: f32[1,32], index: 2, kind: input, shape index: {}]
  %s3 = inlined_call_operand.hbm [shape: f32[16,32], index: 3, kind: output, shape index: {}]
  %s4 = sld [smem:[#allocation0]]
  $region26: #{tpu_custom_call.1} parent=0
    _
  %s6 = ssub.s32 1, %s4
  %s7 = scalar_select 0, %s6, %s4
  $region1: #{tpu_custom_call.1} parent=0
    #allocation2 [shape = 'u8[8192]{0}', space=vmem, size = 0x2000, scoped, tag = 'input window, operand 0, single buffered']
    #allocation3 [shape = 's32[1]{0}', space=sflag, size = 0x4, scoped, tag = 'scoped memory for tpu_custom_call.1']
    #allocation4 [shape = 's32[1]{0}', space=sflag, size = 0x4, scoped, tag = 'scoped memory for tpu_custom_call.1']
    #allocation5 [shape = 'u8[8192]{0}', space=vmem, size = 0x2000, scoped, tag = 'output window, operand 0, single buffered']
    %8 = vsyncpa [#allocation3], 0
    %9 = vsyncpa [#allocation4], 0
    // Predicated region
    $region2: #{tpu_custom_call.1} parent=1 // pred_check
      _
    $region3: #{tpu_custom_call.1} parent=1 // pred_check_branch
      %11 = sbr.rel (0) target = $region5
    $region4: #{tpu_custom_call.1} parent=1 // pred_region
      %s13 = ssub.s32 256, 256
      %14 = vsyncadd [#allocation3], %s13
      %s15 = sshll.u32 [#allocation2], 4
      %s16 = int_to_ptr.vmem [resolvable:$true] %s15
      %21 = dma.hbm_to_vmem [thread:$0]  %s0, 256, %s16, [#allocation3], 128, 128, 8
    $region5: #{tpu_custom_call.1} parent=1 // pred_fallthru
      _
    // Predicated region
    $region6: #{tpu_custom_call.1} parent=1 // pred_check
      _
    $region7: #{tpu_custom_call.1} parent=1 // pred_check_branch
      %23 = sbr.rel (0) target = $region9
    $region8: #{tpu_custom_call.1} parent=1 // pred_region
      _
    $region9: #{tpu_custom_call.1} parent=1 // pred_fallthru
      _
    // Predicated region
    $region10: #{tpu_custom_call.1} parent=1 // pred_check
      _
    $region11: #{tpu_custom_call.1} parent=1 // pred_check_branch
      %25 = sbr.rel (0) target = $region13
    $region12: #{tpu_custom_call.1} parent=1 // pred_region
      _
    $region13: #{tpu_custom_call.1} parent=1 // pred_fallthru
      _
    // Predicated region
    $region14: #{tpu_custom_call.1} parent=1 // pred_check
      _
    $region15: #{tpu_custom_call.1} parent=1 // pred_check_branch
      %27 = sbr.rel (0) target = $region17
    $region16: #{tpu_custom_call.1} parent=1 // pred_region
      %28 = dma.done [#allocation3], 256
    $region17: #{tpu_custom_call.1} parent=1 // pred_fallthru
      _
    %v29 = vld [vmem:[#allocation2] sm:$0xff]
    %v30 = vld [vmem:[#allocation2 + $0x8] sm:$0xff]
    %vm31 = vcmask 261120
    %v32 = vsel %vm31, %v29, 0.0
    %33 = vadd.xlane.f32.xlu0 %v32
    %v34 = vpop.xlane.xlu0 %33
    %v35 = vsel %vm31, %v30, 0.0
    %36 = vadd.xlane.f32.xlu0 %v35
    %v37 = vpop.xlane.xlu0 %36
    %v38 = vrcp.pop 32.0
    %v39 = vmul.f32 %v34, %v38
    %v40 = vmul.f32 %v37, %v38
    %v41 = vsub.f32 %v29, %v39
    %v42 = vsub.f32 %v30, %v40
    %v43 = vmul.f32 %v41, %v41
    %v44 = vmul.f32 %v42, %v42
    %v45 = vsel %vm31, %v43, 0.0
    %46 = vadd.xlane.f32.xlu0 %v45
    %v47 = vpop.xlane.xlu0 %46
    %v48 = vsel %vm31, %v44, 0.0
    %49 = vadd.xlane.f32.xlu0 %v48
    %v50 = vpop.xlane.xlu0 %49
    %v51 = vmul.f32 %v47, %v38
    %v52 = vmul.f32 %v50, %v38
    %v53 = vadd.f32 %v51, 1e-12
    %v54 = vadd.f32 %v52, 1e-12
    %v55 = vrsqrt.pop %v53
    %v56 = vrsqrt.pop %v54
    %v57 = vmul.f32 %v41, %v55
    %v58 = vmul.f32 %v42, %v56
    %v59 = vld [vmem:[%s1] sm:$0x1]
    %v61 = vlaneseq
    %v62 = vshrl.u32 %v61, 7
    %v63 = vsub.s32 0, %v62
    %v64 = vrot.slane %v59, %v63
    %v66 = vmul.f32 %v57, %v64
    %v67 = vmul.f32 %v58, %v64
    %v68 = vld [vmem:[%s2] sm:$0x1]
    %v70 = vlaneseq
    %v71 = vshrl.u32 %v70, 7
    %v72 = vsub.s32 0, %v71
    %v73 = vrot.slane %v68, %v72
    %v75 = vadd.f32 %v66, %v73
    %v76 = vadd.f32 %v67, %v73
    %77 = vst.msk [vmem:[#allocation5] sm:$0xff] %vm31, %v75
    %78 = vst.msk [vmem:[#allocation5 + $0x8] sm:$0xff] %vm31, %v76
    // Predicated region
    $region18: #{tpu_custom_call.1} parent=1 // pred_check
      _
    $region19: #{tpu_custom_call.1} parent=1 // pred_check_branch
      %80 = sbr.rel (0) target = $region21
    $region20: #{tpu_custom_call.1} parent=1 // pred_region
      %s82 = ssub.s32 256, 256
      %83 = vsyncadd [#allocation4], %s82
      %s84 = sshll.u32 [#allocation5], 4
      %s85 = int_to_ptr.vmem [resolvable:$true] %s84
      %90 = dma.vmem_to_hbm [thread:$0]  %s85, 256, %s3, [#allocation4], 128, 128, 8
    $region21: #{tpu_custom_call.1} parent=1 // pred_fallthru
      _
    // Predicated region
    $region22: #{tpu_custom_call.1} parent=1 // pred_check
      _
    $region23: #{tpu_custom_call.1} parent=1 // pred_check_branch
      %92 = sbr.rel (0) target = $region25
    $region24: #{tpu_custom_call.1} parent=1 // pred_region
      %93 = dma.done [#allocation4], 256
    $region25: #{tpu_custom_call.1} parent=1 // pred_fallthru
      _
    %94 = vsyncpa [#allocation3], 1
    %95 = vsyncpa [#allocation4], 1

</llo_original>
